<compile_context>
chip_gen: v7x
topology: tpu7x:2x2x1
jax: 0.10.0
libtpu: 0.0.40
codegen_flags: <defaults>
</compile_context>

<pallas_src>
import jax
import jax.numpy as jnp
from jax.experimental import pallas as pl
from jax.experimental.pallas import tpu as pltpu


def _linear_kernel(x_ref, w_ref, b_ref, o_ref):
    # x_ref: (TILE_B, n_in) VMEM (streamed)
    # w_ref: (1, n_in)      VMEM (resident across grid steps)
    # b_ref: (1,)           SMEM scalar
    # o_ref: (1, TILE_B)    VMEM (lane-dense output row)
    prod = x_ref[...] * w_ref[...]            # VPU elementwise (w broadcast over rows)
    s = jnp.sum(prod, axis=-1)                # XLU lane reduce -> (TILE_B,)
    o_ref[...] = (s + b_ref[0])[None, :].astype(o_ref.dtype)


def _choose_tile_b(batch: int, n_in: int,
                   target_tile_bytes: int = 8 * 1024 * 1024) -> int:
    """Batch tile: multiple of 128 (or the full batch), ~8 MiB of X per tile.

    VMEM footprint is computed against the lane-padded feature width so the
    double-buffered budget stays honest even for small n_in.
    """
    padded_nin = ((n_in + 127) // 128) * 128
    rows = target_tile_bytes // max(1, padded_nin * 4)
    rows = max(128, (rows // 128) * 128)
    if rows >= batch:
        return batch        # whole batch in one block (full-dim blocks are always legal)
    return rows
    # TODO(synk): for very large n_in (>16K) also tile the feature dim to bound VMEM.


def linear_forward(x: jax.Array, weight: jax.Array, bias: jax.Array) -> jax.Array:
    """x: (B, n_in) f32, weight: (n_in, 1) f32, bias: (1,) f32 -> (B, 1) f32."""
    B, n_in = x.shape
    x = x.astype(jnp.float32)
    w_row = weight.reshape(1, n_in).astype(jnp.float32)   # lane-major, stays resident
    b = bias.reshape(1).astype(jnp.float32)                # single SMEM scalar

    tile_b = _choose_tile_b(B, n_in)
    grid = (pl.cdiv(B, tile_b),)

    out_row = pl.pallas_call(
        _linear_kernel,
        out_shape=jax.ShapeDtypeStruct((1, B), jnp.float32),   # lane-dense output slab
        grid=grid,
        in_specs=[
            pl.BlockSpec((tile_b, n_in), lambda i: (i, 0)),         # streamed X tiles
            pl.BlockSpec((1, n_in), lambda i: (0, 0)),              # resident weight row
            pl.BlockSpec(memory_space=pltpu.MemorySpace.SMEM),      # scalar bias
        ],
        out_specs=pl.BlockSpec((1, tile_b), lambda i: (0, i)),
        compiler_params=pltpu.CompilerParams(
            dimension_semantics=("parallel",),       # v7x: shard row tiles over both TCs
            vmem_limit_bytes=32 * 1024 * 1024,       # ~17 MiB double-buffered worst case
        ),
    )(x, w_row, b)

    # (1, B) -> (B, 1): metadata-only reshape on contiguous data.
    return out_row.reshape(B, 1)


if __name__ == "__main__":
    key = jax.random.PRNGKey(0)
    k_x, k_w = jax.random.split(key)

    batch, n_in, sigma = 8, 32, 0.01

    # Deterministic parameter init mirroring torch.normal(0, sigma, (n_in, 1))
    # and torch.zeros(1).
    weight = sigma * jax.random.normal(k_w, (n_in, 1), dtype=jnp.float32)
    bias = jnp.zeros((1,), dtype=jnp.float32)

    x = jax.random.normal(k_x, (batch, n_in), dtype=jnp.float32)

    out = linear_forward(x, weight, bias)
    out = jax.block_until_ready(out)

    # Reference check against plain JAX.
    ref = x @ weight + bias
    assert out.shape == (batch, 1)
    assert jnp.allclose(out, ref, atol=1e-5, rtol=1e-5)

    print("KERNEL_OK")
</pallas_src>

<mosaic_0001>
module attributes {stable_mosaic.version = 11 : i64} {
  func.func @_linear_kernel(%arg0: i32, %arg1: memref<8x32xf32, #tpu.memory_space<vmem>>, %arg2: memref<1x32xf32, #tpu.memory_space<vmem>>, %arg3: memref<1xf32, #tpu.memory_space<smem>>, %arg4: memref<1x8xf32, #tpu.memory_space<vmem>>) attributes {dimension_semantics = [#tpu.dimension_semantics<parallel>], iteration_bounds = array<i64: 1>, scalar_prefetch = 0 : i64, scratch_operands = 0 : i64, tpu.core_type = #tpu.core_type<tc>, window_params = [{transform_indices = @transform_0, window_bounds = array<i64: 8, 32>}, {pipeline_mode = #tpu.pipeline_mode<synchronous>, transform_indices = @transform_1, window_bounds = array<i64: 1, 32>}, {transform_indices = @transform_2, window_bounds = array<i64: 1>}, {transform_indices = @transform_3, window_bounds = array<i64: 1, 8>}]} {
    %c0 = arith.constant 0 : index
    %c0_0 = arith.constant 0 : index
    %0 = vector.load %arg1[%c0, %c0_0] : memref<8x32xf32, #tpu.memory_space<vmem>>, vector<8x32xf32>
    %c0_1 = arith.constant 0 : index
    %c0_2 = arith.constant 0 : index
    %1 = vector.load %arg2[%c0_1, %c0_2] : memref<1x32xf32, #tpu.memory_space<vmem>>, vector<1x32xf32>
    %2 = vector.broadcast %1 : vector<1x32xf32> to vector<8x32xf32>
    %3 = arith.mulf %0, %2 : vector<8x32xf32>
    %cst = arith.constant dense<0.000000e+00> : vector<8xf32>
    %4 = vector.multi_reduction <add>, %3, %cst [1] : vector<8x32xf32> to vector<8xf32>
    %c0_3 = arith.constant 0 : index
    %5 = memref.load %arg3[%c0_3] : memref<1xf32, #tpu.memory_space<smem>>
    %6 = vector.broadcast %5 : f32 to vector<8xf32>
    %7 = arith.addf %4, %6 : vector<8xf32>
    %8 = vector.shape_cast %7 : vector<8xf32> to vector<1x8xf32>
    %c0_4 = arith.constant 0 : index
    %c0_5 = arith.constant 0 : index
    %9 = vector.load %arg4[%c0_4, %c0_5] : memref<1x8xf32, #tpu.memory_space<vmem>>, vector<1x8xf32>
    tpu.vector_store %arg4[%c0_4, %c0_5], %8 {strides = array<i32>} : memref<1x8xf32, #tpu.memory_space<vmem>>, vector<1x8xf32>,
    return
  }
  func.func @transform_0(%arg0: i32) -> (i32, i32) {
    %c0_i32 = arith.constant 0 : i32
    %c0_i32_0 = arith.constant 0 : i32
    return %arg0, %c0_i32 : i32, i32
  }
  func.func @transform_1(%arg0: i32) -> (i32, i32) {
    %c0_i32 = arith.constant 0 : i32
    %c0_i32_0 = arith.constant 0 : i32
    %c0_i32_1 = arith.constant 0 : i32
    return %c0_i32, %c0_i32_0 : i32, i32
  }
  func.func @transform_2(%arg0: i32) -> i32 {
    %c0_i32 = arith.constant 0 : i32
    %c0_i32_0 = arith.constant 0 : i32
    return %c0_i32 : i32
  }
  func.func @transform_3(%arg0: i32) -> (i32, i32) {
    %c0_i32 = arith.constant 0 : i32
    %c0_i32_0 = arith.constant 0 : i32
    return %c0_i32, %arg0 : i32, i32
  }
}

</mosaic_0001>

<llo_original>
// kernel: tpu_custom_call.1
$region0: #{tpu_custom_call.1}
  #allocation0 [shape = 'u32[]', space=smem, size = 0x4, offset = 0x4, fixed_abs, tag = 'smem constant byte address 0x4 - core index']
  #allocation1 [shape = 'u32[144,128]{1,0:T(1,128)}', space=vmem, size = 0x12000, scoped, tag = 'internal scratch']
  #allocation2 [shape = 'f32[1]{0:T(128)S(6)}', space=smem, size = 0x200, scoped, tag = 'scoped memory for tpu_custom_call.1']
  %s0 = inlined_call_operand.hbm [shape: f32[8,32], index: 0, kind: input, shape index: {}]
  %s1 = inlined_call_operand.vmem [shape: f32[1,32], index: 1, kind: input, shape index: {}]
  %s2 = inlined_call_operand.<no memory space> [shape: f32[1], index: 2, kind: input, shape index: {}]
  %s3 = inlined_call_operand.hbm [shape: f32[1,8], index: 3, kind: output, shape index: {}]
  %s4 = sld [smem:[#allocation0]]
  $region26: #{tpu_custom_call.1} parent=0
    _
  %s6 = ssub.s32 1, %s4
  %s7 = scalar_select 0, %s6, %s4
  %8 = sst [smem:[#allocation2]] %s2
  $region1: #{tpu_custom_call.1} parent=0
    #allocation3 [shape = 'u8[4096]{0}', space=vmem, size = 0x1000, scoped, tag = 'input window, operand 0, single buffered']
    #allocation4 [shape = 's32[1]{0}', space=sflag, size = 0x4, scoped, tag = 'scoped memory for tpu_custom_call.1']
    #allocation5 [shape = 's32[1]{0}', space=sflag, size = 0x4, scoped, tag = 'scoped memory for tpu_custom_call.1']
    #allocation6 [shape = 'u8[512]{0}', space=vmem, size = 0x400, scoped, tag = 'output window, operand 0, single buffered']
    %9 = vsyncpa [#allocation4], 0
    %10 = vsyncpa [#allocation5], 0
    // Predicated region
    $region2: #{tpu_custom_call.1} parent=1 // pred_check
      _
    $region3: #{tpu_custom_call.1} parent=1 // pred_check_branch
      %12 = sbr.rel (0) target = $region5
    $region4: #{tpu_custom_call.1} parent=1 // pred_region
      %s14 = ssub.s32 128, 128
      %15 = vsyncadd [#allocation4], %s14
      %s17 = sshll.u32 [#allocation3], 4
      %s18 = int_to_ptr.vmem [resolvable:$true] %s17
      %20 = dma.hbm_to_vmem [thread:$0]  %s0, 128, %s18, [#allocation4]
    $region5: #{tpu_custom_call.1} parent=1 // pred_fallthru
      _
    // Predicated region
    $region6: #{tpu_custom_call.1} parent=1 // pred_check
      _
    $region7: #{tpu_custom_call.1} parent=1 // pred_check_branch
      %22 = sbr.rel (0) target = $region9
    $region8: #{tpu_custom_call.1} parent=1 // pred_region
      _
    $region9: #{tpu_custom_call.1} parent=1 // pred_fallthru
      _
    // Predicated region
    $region10: #{tpu_custom_call.1} parent=1 // pred_check
      _
    $region11: #{tpu_custom_call.1} parent=1 // pred_check_branch
      %24 = sbr.rel (0) target = $region13
    $region12: #{tpu_custom_call.1} parent=1 // pred_region
      _
    $region13: #{tpu_custom_call.1} parent=1 // pred_fallthru
      _
    // Predicated region
    $region14: #{tpu_custom_call.1} parent=1 // pred_check
      _
    $region15: #{tpu_custom_call.1} parent=1 // pred_check_branch
      %26 = sbr.rel (0) target = $region17
    $region16: #{tpu_custom_call.1} parent=1 // pred_region
      %27 = dma.done [#allocation4], 128
    $region17: #{tpu_custom_call.1} parent=1 // pred_fallthru
      _
    %v28 = vld [vmem:[#allocation3] sm:$0xff]
    %v29 = vld [vmem:[%s1] sm:$0x1]
    %v31 = vlaneseq
    %v32 = vshrl.u32 %v31, 7
    %v33 = vsub.s32 0, %v32
    %v34 = vrot.slane %v29, %v33
    %v36 = vmul.f32 %v28, %v34
    %vm37 = vcmask 261120
    %v38 = vsel %vm37, %v36, 0.0
    %39 = vadd.xlane.f32.xlu0 %v38
    %v40 = vpop.xlane.xlu0 %39
    %s41 = sld [smem:[#allocation2]]
    %v42 = vstv %s41
    %v43 = vadd.f32 %v40, %v42
    %v45 = vlaneseq
    %v46 = vand.u32 %v45, 127
    %v47 = vlaneseq
    %v48 = vshrl.u32 %v47, 7
    %v49 = vsub.s32 %v46, %v48
    %v50 = vrot.slane %v43, %v49
    %vm52 = vcmask 57344
    %53 = vst.msk [vmem:[#allocation6] sm:$0x1] %vm52, %v50
    // Predicated region
    $region18: #{tpu_custom_call.1} parent=1 // pred_check
      _
    $region19: #{tpu_custom_call.1} parent=1 // pred_check_branch
      %55 = sbr.rel (0) target = $region21
    $region20: #{tpu_custom_call.1} parent=1 // pred_region
      %s57 = ssub.s32 16, 16
      %58 = vsyncadd [#allocation5], %s57
      %s60 = sshll.u32 [#allocation6], 4
      %s61 = int_to_ptr.vmem [resolvable:$true] %s60
      %63 = dma.vmem_to_hbm [thread:$0]  %s61, 16, %s3, [#allocation5]
    $region21: #{tpu_custom_call.1} parent=1 // pred_fallthru
      _
    // Predicated region
    $region22: #{tpu_custom_call.1} parent=1 // pred_check
      _
    $region23: #{tpu_custom_call.1} parent=1 // pred_check_branch
      %65 = sbr.rel (0) target = $region25
    $region24: #{tpu_custom_call.1} parent=1 // pred_region
      %66 = dma.done [#allocation5], 16
    $region25: #{tpu_custom_call.1} parent=1 // pred_fallthru
      _
    %67 = vsyncpa [#allocation4], 1
    %68 = vsyncpa [#allocation5], 1

</llo_original>
